<compile_context>
chip_gen: v6e
topology: v6e:2x2x1
jax: 0.10.0
libtpu: 0.0.40
codegen_flags: <defaults>
</compile_context>

<pallas_src>
import functools

import jax
import jax.numpy as jnp
from jax.experimental import pallas as pl
from jax.experimental.pallas import tpu as pltpu

N_HIDDEN = 8  # the PyTorch module hardcodes n_hidden = 8


def _round8(r):
    return -(-r // 8) * 8


def _row_offsets(H, F):
    """Row offsets of each group inside the packed (rows, n) weight slab."""
    offs = {}
    o = _round8(7)                       # 7 bias rows, padded to a sublane multiple
    for name, rows in (("enc_w2", _round8(H)), ("dec1_w2", _round8(H)),
                       ("dec2_w2", _round8(H)), ("fcn_wT", _round8(F)),
                       ("w1sT", _round8(H)), ("w1cT", _round8(H)),
                       ("dec1_w1T", _round8(H)), ("dec2_w1T", _round8(H))):
        offs[name] = o
        o += rows
    offs["total"] = o
    return offs


def _tranad_kernel(src_ref,    # (W, B, F)   raw src, native layout
                   slab_ref,   # (rows, n)   single lane-dense weight/bias slab
                   x1_ref,     # (1, B, F)
                   x2_ref,     # (1, B, F)
                   *, H, F, W):
    f32 = jnp.float32
    B = src_ref.shape[1]
    WF = W * F
    n = 2 * WF
    two_f = 2 * F
    offs = _row_offsets(H, F)

    # --- static (cheap) views into the packed slab -------------------------
    enc_b1 = slab_ref[0:1, 0:H]
    enc_b2 = slab_ref[1:2, 0:n]
    dec1_b1 = slab_ref[2:3, 0:H]
    dec1_b2 = slab_ref[3:4, 0:two_f]
    dec2_b1 = slab_ref[4:5, 0:H]
    dec2_b2 = slab_ref[5:6, 0:two_f]
    fcn_b = slab_ref[6:7, 0:F]

    o = offs["enc_w2"];   enc_w2 = slab_ref[o:o + H, 0:n]          # (H, n)
    o = offs["dec1_w2"];  dec1_w2 = slab_ref[o:o + H, 0:two_f]     # (H, 2F)
    o = offs["dec2_w2"];  dec2_w2 = slab_ref[o:o + H, 0:two_f]     # (H, 2F)
    o = offs["fcn_wT"];   fcn_wT = slab_ref[o:o + F, 0:two_f]      # (F, 2F)
    o = offs["w1sT"];     w1sT = slab_ref[o:o + H, 0:WF]           # (H, WF)
    o = offs["w1cT"];     w1cT = slab_ref[o:o + H, 0:WF]           # (H, WF)
    o = offs["dec1_w1T"]; dec1_w1T = slab_ref[o:o + H, 0:n]        # (H, n)
    o = offs["dec2_w1T"]; dec2_w1T = slab_ref[o:o + H, 0:n]        # (H, n)

    def dot(a, b):                    # (M, K) @ (K, N)
        return jnp.dot(a, b, preferred_element_type=f32)

    def dot_t(a, bt):                 # (M, K) x (N, K) -> (M, N), rhs lane-dense
        return jax.lax.dot_general(a, bt, (((1,), (1,)), ((), ())),
                                   preferred_element_type=f32)

    # --- in-kernel src reorder: (W, B, F) -> (B, W*F), column = w*F + f -----
    src_bwf = jnp.concatenate([src_ref[w] for w in range(W)], axis=1)  # (B, WF)

    # Bias broadcasts shared by both passes (hoisted; JAX does not CSE them).
    enc_b1_b = jnp.broadcast_to(enc_b1, (B, H))
    enc_b2_b = jnp.broadcast_to(enc_b2, (B, n))
    fcn_b_b = jnp.broadcast_to(fcn_b, (B, F))

    # Shared first-layer contribution from the src half (the c half is exactly
    # zero in pass 1, so one fused K = W*F dot covers it).
    h_src = dot_t(src_bwf, w1sT)                              # (B, H)

    def tail(h_pre, d_w1T, d_b1, d_w2, d_b2):
        h = jnp.maximum(h_pre + enc_b1_b, 0.0)                # (B, H)
        e = jnp.maximum(dot(h, enc_w2) + enc_b2_b, 0.0)       # (B, n)
        g = jnp.maximum(dot_t(e, d_w1T) + d_b1, 0.0)          # (B, H)
        d = jnp.maximum(dot(g, d_w2) + d_b2, 0.0)             # (B, 2F)
        return jax.nn.sigmoid(dot_t(d, fcn_wT) + fcn_b_b)     # (B, F)

    # Pass 1: c = 0
    x1 = tail(h_src, dec1_w1T, dec1_b1, dec1_w2, dec1_b2)

    # Pass 2: c = (x1 - src)**2, built lane-dense so its first-layer
    # contribution stays one fused K = W*F matmul.
    c = (jnp.tile(x1, (1, W)) - src_bwf) ** 2                 # (B, WF)
    x2 = tail(h_src + dot_t(c, w1cT), dec2_w1T, dec2_b1, dec2_w2, dec2_b2)

    x1_ref[0] = x1
    x2_ref[0] = x2


def pack_params(params):
    """One-time packing of all module weights into a single lane-dense slab.

    Returns a (rows, n) float32 array: 7 bias rows (padded to 8), then
    enc_w2, dec1_w2, dec2_w2 in natural orientation, then fcn_w, the two
    enc_w1 halves (row-permuted by window) and dec1_w1/dec2_w1, all stored
    TRANSPOSED so every row group is 8 rows of lane-dense data.
    """
    H = params['enc_b1'].shape[1]
    two_f = params['dec1_w2'].shape[1]
    F = two_f // 2
    n = params['enc_w1'].shape[0]
    W = n // two_f
    WF = W * F
    offs = _row_offsets(H, F)

    # Row-permute enc_w1 (rows indexed by w*2F + k) into contiguous halves,
    # then transpose so each half is (H, WF) lane-dense.
    w1 = jnp.asarray(params['enc_w1'], jnp.float32).reshape(W, two_f, H)
    w1sT = w1[:, :F, :].reshape(WF, H).T          # (H, WF)
    w1cT = w1[:, F:, :].reshape(WF, H).T          # (H, WF)

    slab = jnp.zeros((offs["total"], n), jnp.float32)

    def put(slab, r, x):
        x = jnp.asarray(x, jnp.float32)
        return slab.at[r:r + x.shape[0], :x.shape[1]].set(x)

    slab = put(slab, 0, params['enc_b1'])
    slab = put(slab, 1, params['enc_b2'])
    slab = put(slab, 2, params['dec1_b1'])
    slab = put(slab, 3, params['dec1_b2'])
    slab = put(slab, 4, params['dec2_b1'])
    slab = put(slab, 5, params['dec2_b2'])
    slab = put(slab, 6, params['fcn_b'])
    slab = put(slab, offs["enc_w2"], params['enc_w2'])
    slab = put(slab, offs["dec1_w2"], params['dec1_w2'])
    slab = put(slab, offs["dec2_w2"], params['dec2_w2'])
    slab = put(slab, offs["fcn_wT"], jnp.asarray(params['fcn_w'], jnp.float32).T)
    slab = put(slab, offs["w1sT"], w1sT)
    slab = put(slab, offs["w1cT"], w1cT)
    slab = put(slab, offs["dec1_w1T"], jnp.asarray(params['dec1_w1'], jnp.float32).T)
    slab = put(slab, offs["dec2_w1T"], jnp.asarray(params['dec2_w1'], jnp.float32).T)
    return slab


@functools.partial(jax.jit, static_argnames=("n_hidden",))
def tranad_forward(src, tgt, slab, *, n_hidden=N_HIDDEN):
    """Pallas implementation of TranAD_Transformer.forward.

    src: (W, B, F) float32; tgt: unused (kept for signature parity with torch).
    slab: pre-packed weight slab from pack_params().
    Returns (x1, x2), each (1, B, F), matching the PyTorch module.
    """
    del tgt  # unused by the reference forward as well
    W, B, F = src.shape
    vmem = pl.BlockSpec(memory_space=pltpu.MemorySpace.VMEM)
    kernel = functools.partial(_tranad_kernel, H=n_hidden, F=F, W=W)
    x1, x2 = pl.pallas_call(
        kernel,
        out_shape=(jax.ShapeDtypeStruct((1, B, F), jnp.float32),
                   jax.ShapeDtypeStruct((1, B, F), jnp.float32)),
        in_specs=[vmem, vmem],
        out_specs=(vmem, vmem),
    )(src, slab)
    return x1, x2


def tranad_ref(src, params):
    """Pure-JAX reference mirroring the PyTorch forward exactly."""
    W, B, F = src.shape

    def seq(x, w1, b1, w2, b2):
        h = jnp.maximum(x @ w1 + b1, 0.0)
        return jnp.maximum(h @ w2 + b2, 0.0)

    def encode(src, c):
        s = jnp.concatenate([src, c], axis=2)                    # (W, B, 2F)
        s = jnp.transpose(s, (1, 0, 2)).reshape(B, -1)           # (B, n)
        return seq(s, params['enc_w1'], params['enc_b1'],
                   params['enc_w2'], params['enc_b2'])

    c = jnp.zeros_like(src)
    x1 = seq(encode(src, c), params['dec1_w1'], params['dec1_b1'],
             params['dec1_w2'], params['dec1_b2'])
    x1 = x1.reshape(-1, 1, 2 * F).transpose(1, 0, 2)             # (1, B, 2F)
    x1 = jax.nn.sigmoid(x1 @ params['fcn_w'] + params['fcn_b'])  # (1, B, F)

    c = (x1 - src) ** 2                                          # (W, B, F)
    x2 = seq(encode(src, c), params['dec2_w1'], params['dec2_b1'],
             params['dec2_w2'], params['dec2_b2'])
    x2 = x2.reshape(-1, 1, 2 * F).transpose(1, 0, 2)
    x2 = jax.nn.sigmoid(x2 @ params['fcn_w'] + params['fcn_b'])
    return x1, x2


if __name__ == "__main__":
    feats, batch, window, hidden = 8, 16, 10, N_HIDDEN   # n_window/n_hidden from __init__
    n = 2 * feats * window

    key = jax.random.PRNGKey(0)
    ks = jax.random.split(key, 16)

    def init(k, shape, scale=0.1):
        return jax.random.normal(k, shape, dtype=jnp.float32) * scale

    params = {
        'enc_w1':  init(ks[0],  (n, hidden)),
        'enc_b1':  init(ks[1],  (1, hidden)),
        'enc_w2':  init(ks[2],  (hidden, n)),
        'enc_b2':  init(ks[3],  (1, n)),
        'dec1_w1': init(ks[4],  (n, hidden)),
        'dec1_b1': init(ks[5],  (1, hidden)),
        'dec1_w2': init(ks[6],  (hidden, 2 * feats)),
        'dec1_b2': init(ks[7],  (1, 2 * feats)),
        'dec2_w1': init(ks[8],  (n, hidden)),
        'dec2_b1': init(ks[9],  (1, hidden)),
        'dec2_w2': init(ks[10], (hidden, 2 * feats)),
        'dec2_b2': init(ks[11], (1, 2 * feats)),
        'fcn_w':   init(ks[12], (2 * feats, feats)),
        'fcn_b':   init(ks[13], (1, feats)),
    }

    src = jax.random.normal(ks[14], (window, batch, feats), dtype=jnp.float32)
    tgt = jax.random.normal(ks[15], (1, batch, feats), dtype=jnp.float32)

    # One-time weight packing (hoisted out of the per-call hot path).
    slab = jax.block_until_ready(pack_params(params))

    x1, x2 = tranad_forward(src, tgt, slab)
    jax.block_until_ready((x1, x2))

    r1, r2 = tranad_ref(src, params)
    assert x1.shape == (1, batch, feats) and x2.shape == (1, batch, feats)
    assert jnp.allclose(x1, r1, atol=1e-4, rtol=1e-4), "x1 mismatch vs reference"
    assert jnp.allclose(x2, r2, atol=1e-4, rtol=1e-4), "x2 mismatch vs reference"

    print("KERNEL_OK")
</pallas_src>

<mosaic_0001>
module attributes {stable_mosaic.version = 11 : i64} {
  func.func @_tranad_kernel(%arg0: memref<10x16x8xf32, #tpu.memory_space<vmem>>, %arg1: memref<72x160xf32, #tpu.memory_space<vmem>>, %arg2: memref<1x16x8xf32, #tpu.memory_space<vmem>>, %arg3: memref<1x16x8xf32, #tpu.memory_space<vmem>>) attributes {dimension_semantics = [], scalar_prefetch = 0 : i64, scratch_operands = 0 : i64, tpu.core_type = #tpu.core_type<tc>} {
    %c0 = arith.constant 0 : index
    %c0_0 = arith.constant 0 : index
    %0 = vector.load %arg1[%c0, %c0_0] : memref<72x160xf32, #tpu.memory_space<vmem>>, vector<1x8xf32>
    %c1 = arith.constant 1 : index
    %c0_1 = arith.constant 0 : index
    %1 = vector.load %arg1[%c1, %c0_1] : memref<72x160xf32, #tpu.memory_space<vmem>>, vector<1x160xf32>
    %c2 = arith.constant 2 : index
    %c0_2 = arith.constant 0 : index
    %2 = vector.load %arg1[%c2, %c0_2] : memref<72x160xf32, #tpu.memory_space<vmem>>, vector<1x8xf32>
    %c3 = arith.constant 3 : index
    %c0_3 = arith.constant 0 : index
    %3 = vector.load %arg1[%c3, %c0_3] : memref<72x160xf32, #tpu.memory_space<vmem>>, vector<1x16xf32>
    %c4 = arith.constant 4 : index
    %c0_4 = arith.constant 0 : index
    %4 = vector.load %arg1[%c4, %c0_4] : memref<72x160xf32, #tpu.memory_space<vmem>>, vector<1x8xf32>
    %c5 = arith.constant 5 : index
    %c0_5 = arith.constant 0 : index
    %5 = vector.load %arg1[%c5, %c0_5] : memref<72x160xf32, #tpu.memory_space<vmem>>, vector<1x16xf32>
    %c6 = arith.constant 6 : index
    %c0_6 = arith.constant 0 : index
    %6 = vector.load %arg1[%c6, %c0_6] : memref<72x160xf32, #tpu.memory_space<vmem>>, vector<1x8xf32>
    %c8 = arith.constant 8 : index
    %c0_7 = arith.constant 0 : index
    %7 = vector.load %arg1[%c8, %c0_7] : memref<72x160xf32, #tpu.memory_space<vmem>>, vector<8x160xf32>
    %c16 = arith.constant 16 : index
    %c0_8 = arith.constant 0 : index
    %8 = vector.load %arg1[%c16, %c0_8] : memref<72x160xf32, #tpu.memory_space<vmem>>, vector<8x16xf32>
    %c24 = arith.constant 24 : index
    %c0_9 = arith.constant 0 : index
    %9 = vector.load %arg1[%c24, %c0_9] : memref<72x160xf32, #tpu.memory_space<vmem>>, vector<8x16xf32>
    %c32 = arith.constant 32 : index
    %c0_10 = arith.constant 0 : index
    %10 = vector.load %arg1[%c32, %c0_10] : memref<72x160xf32, #tpu.memory_space<vmem>>, vector<8x16xf32>
    %c40 = arith.constant 40 : index
    %c0_11 = arith.constant 0 : index
    %11 = vector.load %arg1[%c40, %c0_11] : memref<72x160xf32, #tpu.memory_space<vmem>>, vector<8x80xf32>
    %c48 = arith.constant 48 : index
    %c0_12 = arith.constant 0 : index
    %12 = vector.load %arg1[%c48, %c0_12] : memref<72x160xf32, #tpu.memory_space<vmem>>, vector<8x80xf32>
    %c56 = arith.constant 56 : index
    %c0_13 = arith.constant 0 : index
    %13 = vector.load %arg1[%c56, %c0_13] : memref<72x160xf32, #tpu.memory_space<vmem>>, vector<8x160xf32>
    %c64 = arith.constant 64 : index
    %c0_14 = arith.constant 0 : index
    %14 = vector.load %arg1[%c64, %c0_14] : memref<72x160xf32, #tpu.memory_space<vmem>>, vector<8x160xf32>
    %c0_15 = arith.constant 0 : index
    %c0_16 = arith.constant 0 : index
    %c0_17 = arith.constant 0 : index
    %15 = vector.load %arg0[%c0_15, %c0_16, %c0_17] : memref<10x16x8xf32, #tpu.memory_space<vmem>>, vector<1x16x8xf32>
    %16 = vector.shape_cast %15 : vector<1x16x8xf32> to vector<16x8xf32>
    %c1_18 = arith.constant 1 : index
    %c0_19 = arith.constant 0 : index
    %c0_20 = arith.constant 0 : index
    %17 = vector.load %arg0[%c1_18, %c0_19, %c0_20] : memref<10x16x8xf32, #tpu.memory_space<vmem>>, vector<1x16x8xf32>
    %18 = vector.shape_cast %17 : vector<1x16x8xf32> to vector<16x8xf32>
    %c2_21 = arith.constant 2 : index
    %c0_22 = arith.constant 0 : index
    %c0_23 = arith.constant 0 : index
    %19 = vector.load %arg0[%c2_21, %c0_22, %c0_23] : memref<10x16x8xf32, #tpu.memory_space<vmem>>, vector<1x16x8xf32>
    %20 = vector.shape_cast %19 : vector<1x16x8xf32> to vector<16x8xf32>
    %c3_24 = arith.constant 3 : index
    %c0_25 = arith.constant 0 : index
    %c0_26 = arith.constant 0 : index
    %21 = vector.load %arg0[%c3_24, %c0_25, %c0_26] : memref<10x16x8xf32, #tpu.memory_space<vmem>>, vector<1x16x8xf32>
    %22 = vector.shape_cast %21 : vector<1x16x8xf32> to vector<16x8xf32>
    %c4_27 = arith.constant 4 : index
    %c0_28 = arith.constant 0 : index
    %c0_29 = arith.constant 0 : index
    %23 = vector.load %arg0[%c4_27, %c0_28, %c0_29] : memref<10x16x8xf32, #tpu.memory_space<vmem>>, vector<1x16x8xf32>
    %24 = vector.shape_cast %23 : vector<1x16x8xf32> to vector<16x8xf32>
    %c5_30 = arith.constant 5 : index
    %c0_31 = arith.constant 0 : index
    %c0_32 = arith.constant 0 : index
    %25 = vector.load %arg0[%c5_30, %c0_31, %c0_32] : memref<10x16x8xf32, #tpu.memory_space<vmem>>, vector<1x16x8xf32>
    %26 = vector.shape_cast %25 : vector<1x16x8xf32> to vector<16x8xf32>
    %c6_33 = arith.constant 6 : index
    %c0_34 = arith.constant 0 : index
    %c0_35 = arith.constant 0 : index
    %27 = vector.load %arg0[%c6_33, %c0_34, %c0_35] : memref<10x16x8xf32, #tpu.memory_space<vmem>>, vector<1x16x8xf32>
    %28 = vector.shape_cast %27 : vector<1x16x8xf32> to vector<16x8xf32>
    %c7 = arith.constant 7 : index
    %c0_36 = arith.constant 0 : index
    %c0_37 = arith.constant 0 : index
    %29 = vector.load %arg0[%c7, %c0_36, %c0_37] : memref<10x16x8xf32, #tpu.memory_space<vmem>>, vector<1x16x8xf32>
    %30 = vector.shape_cast %29 : vector<1x16x8xf32> to vector<16x8xf32>
    %c8_38 = arith.constant 8 : index
    %c0_39 = arith.constant 0 : index
    %c0_40 = arith.constant 0 : index
    %31 = vector.load %arg0[%c8_38, %c0_39, %c0_40] : memref<10x16x8xf32, #tpu.memory_space<vmem>>, vector<1x16x8xf32>
    %32 = vector.shape_cast %31 : vector<1x16x8xf32> to vector<16x8xf32>
    %c9 = arith.constant 9 : index
    %c0_41 = arith.constant 0 : index
    %c0_42 = arith.constant 0 : index
    %33 = vector.load %arg0[%c9, %c0_41, %c0_42] : memref<10x16x8xf32, #tpu.memory_space<vmem>>, vector<1x16x8xf32>
    %34 = vector.shape_cast %33 : vector<1x16x8xf32> to vector<16x8xf32>
    %35 = tpu.concatenate %16, %18, %20, %22, %24, %26, %28, %30, %32, %34 in 1 : vector<16x8xf32>, vector<16x8xf32>, vector<16x8xf32>, vector<16x8xf32>, vector<16x8xf32>, vector<16x8xf32>, vector<16x8xf32>, vector<16x8xf32>, vector<16x8xf32>, vector<16x8xf32> -> vector<16x80xf32>
    %36 = vector.shape_cast %0 : vector<1x8xf32> to vector<1x8xf32>
    %37 = vector.broadcast %36 : vector<1x8xf32> to vector<16x8xf32>
    %38 = vector.shape_cast %1 : vector<1x160xf32> to vector<1x160xf32>
    %39 = vector.broadcast %38 : vector<1x160xf32> to vector<16x160xf32>
    %40 = vector.shape_cast %6 : vector<1x8xf32> to vector<1x8xf32>
    %41 = vector.broadcast %40 : vector<1x8xf32> to vector<16x8xf32>
    %cst = arith.constant dense<0.000000e+00> : vector<16x8xf32>
    %42 = tpu.matmul %35, %11, %cst {dimension_numbers = #tpu.dot_dimension_numbers<[1], [1], [0], [0], [0, 0, 1, 0], [], []>} : vector<16x80xf32>, vector<8x80xf32>, vector<16x8xf32> -> vector<16x8xf32>
    %43 = arith.addf %42, %37 : vector<16x8xf32>
    %cst_43 = arith.constant 0.000000e+00 : f32
    %44 = vector.broadcast %cst_43 : f32 to vector<16x8xf32>
    %45 = arith.maximumf %43, %44 : vector<16x8xf32>
    %cst_44 = arith.constant dense<0.000000e+00> : vector<16x160xf32>
    %46 = tpu.matmul %45, %7, %cst_44 {dimension_numbers = #tpu.dot_dimension_numbers<[1], [0], [0], [1], [0, 0, 1, 1], [], []>} : vector<16x8xf32>, vector<8x160xf32>, vector<16x160xf32> -> vector<16x160xf32>
    %47 = arith.addf %46, %39 : vector<16x160xf32>
    %cst_45 = arith.constant 0.000000e+00 : f32
    %48 = vector.broadcast %cst_45 : f32 to vector<16x160xf32>
    %49 = arith.maximumf %47, %48 : vector<16x160xf32>
    %cst_46 = arith.constant dense<0.000000e+00> : vector<16x8xf32>
    %50 = tpu.matmul %49, %13, %cst_46 {dimension_numbers = #tpu.dot_dimension_numbers<[1], [1], [0], [0], [0, 0, 1, 0], [], []>} : vector<16x160xf32>, vector<8x160xf32>, vector<16x8xf32> -> vector<16x8xf32>
    %51 = vector.broadcast %2 : vector<1x8xf32> to vector<16x8xf32>
    %52 = arith.addf %50, %51 : vector<16x8xf32>
    %cst_47 = arith.constant 0.000000e+00 : f32
    %53 = vector.broadcast %cst_47 : f32 to vector<16x8xf32>
    %54 = arith.maximumf %52, %53 : vector<16x8xf32>
    %cst_48 = arith.constant dense<0.000000e+00> : vector<16x16xf32>
    %55 = tpu.matmul %54, %8, %cst_48 {dimension_numbers = #tpu.dot_dimension_numbers<[1], [0], [0], [1], [0, 0, 1, 1], [], []>} : vector<16x8xf32>, vector<8x16xf32>, vector<16x16xf32> -> vector<16x16xf32>
    %56 = vector.broadcast %3 : vector<1x16xf32> to vector<16x16xf32>
    %57 = arith.addf %55, %56 : vector<16x16xf32>
    %cst_49 = arith.constant 0.000000e+00 : f32
    %58 = vector.broadcast %cst_49 : f32 to vector<16x16xf32>
    %59 = arith.maximumf %57, %58 : vector<16x16xf32>
    %cst_50 = arith.constant dense<0.000000e+00> : vector<16x8xf32>
    %60 = tpu.matmul %59, %10, %cst_50 {dimension_numbers = #tpu.dot_dimension_numbers<[1], [1], [0], [0], [0, 0, 1, 0], [], []>} : vector<16x16xf32>, vector<8x16xf32>, vector<16x8xf32> -> vector<16x8xf32>
    %61 = arith.addf %60, %41 : vector<16x8xf32>
    %62 = arith.negf %61 : vector<16x8xf32>
    %63 = math.exp %62 : vector<16x8xf32>
    %cst_51 = arith.constant 1.000000e+00 : f32
    %64 = vector.broadcast %cst_51 : f32 to vector<16x8xf32>
    %65 = arith.addf %64, %63 : vector<16x8xf32>
    %66 = arith.divf %64, %65 : vector<16x8xf32>
    %67 = tpu.concatenate %66, %66, %66, %66, %66, %66, %66, %66, %66, %66 in 1 : vector<16x8xf32>, vector<16x8xf32>, vector<16x8xf32>, vector<16x8xf32>, vector<16x8xf32>, vector<16x8xf32>, vector<16x8xf32>, vector<16x8xf32>, vector<16x8xf32>, vector<16x8xf32> -> vector<16x80xf32>
    %68 = arith.subf %67, %35 : vector<16x80xf32>
    %69 = arith.mulf %68, %68 : vector<16x80xf32>
    %cst_52 = arith.constant dense<0.000000e+00> : vector<16x8xf32>
    %70 = tpu.matmul %69, %12, %cst_52 {dimension_numbers = #tpu.dot_dimension_numbers<[1], [1], [0], [0], [0, 0, 1, 0], [], []>} : vector<16x80xf32>, vector<8x80xf32>, vector<16x8xf32> -> vector<16x8xf32>
    %71 = arith.addf %42, %70 : vector<16x8xf32>
    %72 = arith.addf %71, %37 : vector<16x8xf32>
    %cst_53 = arith.constant 0.000000e+00 : f32
    %73 = vector.broadcast %cst_53 : f32 to vector<16x8xf32>
    %74 = arith.maximumf %72, %73 : vector<16x8xf32>
    %cst_54 = arith.constant dense<0.000000e+00> : vector<16x160xf32>
    %75 = tpu.matmul %74, %7, %cst_54 {dimension_numbers = #tpu.dot_dimension_numbers<[1], [0], [0], [1], [0, 0, 1, 1], [], []>} : vector<16x8xf32>, vector<8x160xf32>, vector<16x160xf32> -> vector<16x160xf32>
    %76 = arith.addf %75, %39 : vector<16x160xf32>
    %cst_55 = arith.constant 0.000000e+00 : f32
    %77 = vector.broadcast %cst_55 : f32 to vector<16x160xf32>
    %78 = arith.maximumf %76, %77 : vector<16x160xf32>
    %cst_56 = arith.constant dense<0.000000e+00> : vector<16x8xf32>
    %79 = tpu.matmul %78, %14, %cst_56 {dimension_numbers = #tpu.dot_dimension_numbers<[1], [1], [0], [0], [0, 0, 1, 0], [], []>} : vector<16x160xf32>, vector<8x160xf32>, vector<16x8xf32> -> vector<16x8xf32>
    %80 = vector.broadcast %4 : vector<1x8xf32> to vector<16x8xf32>
    %81 = arith.addf %79, %80 : vector<16x8xf32>
    %cst_57 = arith.constant 0.000000e+00 : f32
    %82 = vector.broadcast %cst_57 : f32 to vector<16x8xf32>
    %83 = arith.maximumf %81, %82 : vector<16x8xf32>
    %cst_58 = arith.constant dense<0.000000e+00> : vector<16x16xf32>
    %84 = tpu.matmul %83, %9, %cst_58 {dimension_numbers = #tpu.dot_dimension_numbers<[1], [0], [0], [1], [0, 0, 1, 1], [], []>} : vector<16x8xf32>, vector<8x16xf32>, vector<16x16xf32> -> vector<16x16xf32>
    %85 = vector.broadcast %5 : vector<1x16xf32> to vector<16x16xf32>
    %86 = arith.addf %84, %85 : vector<16x16xf32>
    %cst_59 = arith.constant 0.000000e+00 : f32
    %87 = vector.broadcast %cst_59 : f32 to vector<16x16xf32>
    %88 = arith.maximumf %86, %87 : vector<16x16xf32>
    %cst_60 = arith.constant dense<0.000000e+00> : vector<16x8xf32>
    %89 = tpu.matmul %88, %10, %cst_60 {dimension_numbers = #tpu.dot_dimension_numbers<[1], [1], [0], [0], [0, 0, 1, 0], [], []>} : vector<16x16xf32>, vector<8x16xf32>, vector<16x8xf32> -> vector<16x8xf32>
    %90 = arith.addf %89, %41 : vector<16x8xf32>
    %91 = arith.negf %90 : vector<16x8xf32>
    %92 = math.exp %91 : vector<16x8xf32>
    %cst_61 = arith.constant 1.000000e+00 : f32
    %93 = vector.broadcast %cst_61 : f32 to vector<16x8xf32>
    %94 = arith.addf %93, %92 : vector<16x8xf32>
    %95 = arith.divf %93, %94 : vector<16x8xf32>
    %c0_62 = arith.constant 0 : index
    %c0_63 = arith.constant 0 : index
    %c0_64 = arith.constant 0 : index
    %96 = vector.load %arg2[%c0_62, %c0_63, %c0_64] : memref<1x16x8xf32, #tpu.memory_space<vmem>>, vector<1x16x8xf32>
    %97 = vector.shape_cast %96 : vector<1x16x8xf32> to vector<16x8xf32>
    %98 = vector.shape_cast %66 : vector<16x8xf32> to vector<1x16x8xf32>
    tpu.vector_store %arg2[%c0_62, %c0_63, %c0_64], %98 {strides = array<i32>} : memref<1x16x8xf32, #tpu.memory_space<vmem>>, vector<1x16x8xf32>,
    %c0_65 = arith.constant 0 : index
    %c0_66 = arith.constant 0 : index
    %c0_67 = arith.constant 0 : index
    %99 = vector.load %arg3[%c0_65, %c0_66, %c0_67] : memref<1x16x8xf32, #tpu.memory_space<vmem>>, vector<1x16x8xf32>
    %100 = vector.shape_cast %99 : vector<1x16x8xf32> to vector<16x8xf32>
    %101 = vector.shape_cast %95 : vector<16x8xf32> to vector<1x16x8xf32>
    tpu.vector_store %arg3[%c0_65, %c0_66, %c0_67], %101 {strides = array<i32>} : memref<1x16x8xf32, #tpu.memory_space<vmem>>, vector<1x16x8xf32>,
    return
  }
}

</mosaic_0001>

<llo_original>
// kernel: tranad_forward.1
$region0: #{tranad_forward.1}
  #allocation0 [shape = 'u32[]', space=smem, size = 0x4, offset = 0x4, fixed_abs, tag = 'smem constant byte address 0x4 - core index']
  #allocation1 [shape = 'u32[144,128]{1,0:T(1,128)}', space=vmem, size = 0x12000, scoped, tag = 'internal scratch']
  %s0 = inlined_call_operand.vmem [shape: f32[10,16,8], index: 0, kind: input, shape index: {}]
  %s1 = inlined_call_operand.vmem [shape: f32[72,160], index: 1, kind: input, shape index: {}]
  %s2 = inlined_call_operand.vmem [shape: f32[1,16,8], index: 2, kind: output, shape index: {0}]
  %s3 = inlined_call_operand.vmem [shape: f32[1,16,8], index: 3, kind: output, shape index: {1}]
  %4 = xla_tuple %s2, %s3
  %s5 = sld [smem:[#allocation0]]
  $region26: #{tranad_forward.1} parent=0
    _
  %s7 = ssub.s32 1, %s5
  %s8 = scalar_select 0, %s7, %s5
  // Predicated region
  $region2: #{tranad_forward.1} parent=0 // pred_check
    _
  $region3: #{tranad_forward.1} parent=0 // pred_check_branch
    %10 = sbr.rel (0) target = $region5
  $region4: #{tranad_forward.1} parent=0 // pred_region
    _
  $region5: #{tranad_forward.1} parent=0 // pred_fallthru
    _
  // Predicated region
  $region6: #{tranad_forward.1} parent=0 // pred_check
    _
  $region7: #{tranad_forward.1} parent=0 // pred_check_branch
    %12 = sbr.rel (0) target = $region9
  $region8: #{tranad_forward.1} parent=0 // pred_region
    _
  $region9: #{tranad_forward.1} parent=0 // pred_fallthru
    _
  %v13 = vld [vmem:[%s1] ss:$0 sm:$0xff]
  %s14 = scalar_lea.vmem %s1, 1
  %v15 = vld [vmem:[%s14] ss:$8 sm:$0x3]
  %v16 = vld [vmem:[%s1 + $0x2] ss:$0 sm:$0xff]
  %v17 = vld [vmem:[%s1 + $0x3] ss:$0 sm:$0xff]
  %v18 = vld [vmem:[%s1 + $0x4] ss:$0 sm:$0xff]
  %v19 = vld [vmem:[%s1 + $0x5] ss:$0 sm:$0xff]
  %v20 = vld [vmem:[%s1 + $0x6] ss:$0 sm:$0xff]
  %v21 = vld [vmem:[%s1 + $0x10] sm:$0xff]
  %v22 = vld [vmem:[%s1 + $0x18] sm:$0xff]
  %v23 = vld [vmem:[%s1 + $0x20] sm:$0xff]
  %v24 = vld [vmem:[%s1 + $0x30] sm:$0xff]
  %v25 = vld [vmem:[%s1 + $0x40] sm:$0xff]
  %v26 = vld [vmem:[%s1 + $0x50] sm:$0xff]
  %v27 = vld [vmem:[%s1 + $0x60] sm:$0xff]
  %v28 = vld [vmem:[%s1 + $0x70] sm:$0xff]
  %v29 = vld [vmem:[%s1 + $0x78] sm:$0xff]
  %v30 = vld [vmem:[%s1 + $0x80] sm:$0xff]
  %v31 = vld [vmem:[%s1 + $0x88] sm:$0xff]
  %v32 = vld [vmem:[%s0] sm:$0xff]
  %v33 = vld [vmem:[%s0 + $0x8] sm:$0xff]
  %s34 = scalar_lea.vmem %s0, 16
  %v35 = vld [vmem:[%s34] sm:$0xff]
  %v36 = vld [vmem:[%s34 + $0x8] sm:$0xff]
  %s37 = scalar_lea.vmem %s0, 32
  %v38 = vld [vmem:[%s37] sm:$0xff]
  %v39 = vld [vmem:[%s37 + $0x8] sm:$0xff]
  %s40 = scalar_lea.vmem %s0, 48
  %v41 = vld [vmem:[%s40] sm:$0xff]
  %v42 = vld [vmem:[%s40 + $0x8] sm:$0xff]
  %s43 = scalar_lea.vmem %s0, 64
  %v44 = vld [vmem:[%s43] sm:$0xff]
  %v45 = vld [vmem:[%s43 + $0x8] sm:$0xff]
  %s46 = scalar_lea.vmem %s0, 80
  %v47 = vld [vmem:[%s46] sm:$0xff]
  %v48 = vld [vmem:[%s46 + $0x8] sm:$0xff]
  %s49 = scalar_lea.vmem %s0, 96
  %v50 = vld [vmem:[%s49] sm:$0xff]
  %v51 = vld [vmem:[%s49 + $0x8] sm:$0xff]
  %s52 = scalar_lea.vmem %s0, 112
  %v53 = vld [vmem:[%s52] sm:$0xff]
  %v54 = vld [vmem:[%s52 + $0x8] sm:$0xff]
  %s55 = scalar_lea.vmem %s0, 128
  %v56 = vld [vmem:[%s55] sm:$0xff]
  %v57 = vld [vmem:[%s55 + $0x8] sm:$0xff]
  %s58 = scalar_lea.vmem %s0, 144
  %v59 = vld [vmem:[%s58] sm:$0xff]
  %v60 = vld [vmem:[%s58 + $0x8] sm:$0xff]
  %63 = vrot.lane.b32.xlu0 %v35, 8
  %v64 = vpop.permute.xlu0 %63
  %65 = vrot.lane.b32.xlu0 %v36, 8
  %v66 = vpop.permute.xlu0 %65
  %71 = vrot.lane.b32.xlu0 %v38, 16
  %v72 = vpop.permute.xlu0 %71
  %73 = vrot.lane.b32.xlu0 %v39, 16
  %v74 = vpop.permute.xlu0 %73
  %79 = vrot.lane.b32.xlu0 %v41, 24
  %v80 = vpop.permute.xlu0 %79
  %81 = vrot.lane.b32.xlu0 %v42, 24
  %v82 = vpop.permute.xlu0 %81
  %87 = vrot.lane.b32.xlu0 %v44, 32
  %v88 = vpop.permute.xlu0 %87
  %89 = vrot.lane.b32.xlu0 %v45, 32
  %v90 = vpop.permute.xlu0 %89
  %95 = vrot.lane.b32.xlu0 %v47, 40
  %v96 = vpop.permute.xlu0 %95
  %97 = vrot.lane.b32.xlu0 %v48, 40
  %v98 = vpop.permute.xlu0 %97
  %103 = vrot.lane.b32.xlu0 %v50, 48
  %v104 = vpop.permute.xlu0 %103
  %105 = vrot.lane.b32.xlu0 %v51, 48
  %v106 = vpop.permute.xlu0 %105
  %111 = vrot.lane.b32.xlu0 %v53, 56
  %v112 = vpop.permute.xlu0 %111
  %113 = vrot.lane.b32.xlu0 %v54, 56
  %v114 = vpop.permute.xlu0 %113
  %119 = vrot.lane.b32.xlu0 %v56, 64
  %v120 = vpop.permute.xlu0 %119
  %121 = vrot.lane.b32.xlu0 %v57, 64
  %v122 = vpop.permute.xlu0 %121
  %127 = vrot.lane.b32.xlu0 %v59, 72
  %v128 = vpop.permute.xlu0 %127
  %129 = vrot.lane.b32.xlu0 %v60, 72
  %v130 = vpop.permute.xlu0 %129
  %vm133 = vcmask 64512
  %v134 = vsel %vm133, %v32, %v64
  %v135 = vsel %vm133, %v33, %v66
  %vm136 = vcmask 130048
  %v137 = vsel %vm136, %v134, %v72
  %v138 = vsel %vm136, %v135, %v74
  %vm139 = vcmask 195584
  %v140 = vsel %vm139, %v137, %v80
  %v141 = vsel %vm139, %v138, %v82
  %vm142 = vcmask 261120
  %v143 = vsel %vm142, %v140, %v88
  %v144 = vsel %vm142, %v141, %v90
  %vm145 = vcmask 326656
  %v146 = vsel %vm145, %v143, %v96
  %v147 = vsel %vm145, %v144, %v98
  %vm148 = vcmask 392192
  %v149 = vsel %vm148, %v146, %v104
  %v150 = vsel %vm148, %v147, %v106
  %vm151 = vcmask 457728
  %v152 = vsel %vm151, %v149, %v112
  %v153 = vsel %vm151, %v150, %v114
  %vm154 = vcmask 523264
  %v155 = vsel %vm154, %v152, %v120
  %v156 = vsel %vm154, %v153, %v122
  %vm157 = vcmask 588800
  %v158 = vsel %vm157, %v155, %v128
  %v159 = vsel %vm157, %v156, %v130
  %v161 = vlaneseq
  %v162 = vshrl.u32 %v161, 7
  %v163 = vsub.s32 0, %v162
  %v164 = vrot.slane %v15, %v163
  %v165 = vlaneseq
  %v166 = vshrl.u32 %v165, 7
  %v167 = vsub.s32 1, %v166
  %v168 = vrot.slane %v15, %v167
  %vm171 = vcmask 654336
  %v173 = vsel %vm171, %v158, 0
  %v176 = vsel %vm171, %v159, 0
  %v179 = vsel %vm171, %v26, 0
  %181 = vmatprep.subr.mxu0 0.0
  %182 = vmatpush1.xpose.msra.mxu0 0.0
  %183 = vmatprep.subr.mxu0 0.0
  %184 = vmatpush1.xpose.msra.mxu0 0.0
  %185 = vmatprep.subr.mxu0 0.0
  %186 = vmatpush1.xpose.msra.mxu0 0.0
  %187 = vmatprep.subr.mxu0 0.0
  %188 = vmatpush1.xpose.msra.mxu0 0.0
  %189 = vmatprep.subr.mxu0 0.0
  %190 = vmatpush1.xpose.msra.mxu0 0.0
  %191 = vmatprep.subr.mxu0 0.0
  %192 = vmatpush1.xpose.msra.mxu0 0.0
  %193 = vmatprep.subr.mxu0 0.0
  %194 = vmatpush1.xpose.msra.mxu0 0.0
  %195 = vmatprep.subr.mxu0 0.0
  %196 = vmatpush1.xpose.msra.mxu0 0.0
  %197 = vmatprep.subr.mxu0 0.0
  %198 = vmatpush1.xpose.msra.mxu0 0.0
  %199 = vmatprep.subr.mxu0 0.0
  %200 = vmatpush1.xpose.msra.mxu0 0.0
  %201 = vmatprep.subr.mxu0 0.0
  %202 = vmatpush1.xpose.msra.mxu0 0.0
  %203 = vmatprep.subr.mxu0 0.0
  %204 = vmatpush1.xpose.msra.mxu0 0.0
  %205 = vmatprep.subr.mxu0 0.0
  %206 = vmatpush1.xpose.msra.mxu0 0.0
  %207 = vmatprep.subr.mxu0 0.0
  %208 = vmatpush1.xpose.msra.mxu0 0.0
  %209 = vmatprep.subr.mxu0 0.0
  %210 = vmatpush1.xpose.msra.mxu0 0.0
  %211 = vmatprep.subr.mxu0 0.0
  %212 = vmatpush1.xpose.msra.mxu0 %v179
  %213 = vmatprep.subr.mxu0 0.0
  %214 = vmatpush2.xpose.msra.mxu0 0.0
  %215 = vmatprep.subr.mxu0 0.0
  %216 = vmatpush2.xpose.msra.mxu0 0.0
  %217 = vmatprep.subr.mxu0 0.0
  %218 = vmatpush2.xpose.msra.mxu0 0.0
  %219 = vmatprep.subr.mxu0 0.0
  %220 = vmatpush2.xpose.msra.mxu0 0.0
  %221 = vmatprep.subr.mxu0 0.0
  %222 = vmatpush2.xpose.msra.mxu0 0.0
  %223 = vmatprep.subr.mxu0 0.0
  %224 = vmatpush2.xpose.msra.mxu0 0.0
  %225 = vmatprep.subr.mxu0 0.0
  %226 = vmatpush2.xpose.msra.mxu0 0.0
  %227 = vmatprep.subr.mxu0 0.0
  %228 = vmatpush2.xpose.msra.mxu0 0.0
  %229 = vmatprep.subr.mxu0 0.0
  %230 = vmatpush2.xpose.msra.mxu0 0.0
  %231 = vmatprep.subr.mxu0 0.0
  %232 = vmatpush2.xpose.msra.mxu0 0.0
  %233 = vmatprep.subr.mxu0 0.0
  %234 = vmatpush2.xpose.msra.mxu0 0.0
  %235 = vmatprep.subr.mxu0 0.0
  %236 = vmatpush2.xpose.msra.mxu0 0.0
  %237 = vmatprep.subr.mxu0 0.0
  %238 = vmatpush2.xpose.msra.mxu0 0.0
  %239 = vmatprep.subr.mxu0 0.0
  %240 = vmatpush2.xpose.msra.mxu0 0.0
  %241 = vmatprep.subr.mxu0 0.0
  %242 = vmatpush2.xpose.msra.mxu0 0.0
  %243 = vmatprep.subr.mxu0 0.0
  %244 = vmatpush2.xpose.msra.mxu0 0.0
  %245 = vmatprep.mubr.f32.mxu0 0.0
  %246 = vmatmul.mubr.f32.gmra.mxu0 %v173
  %v247 = vpop.f32.mrf.mxu0
  %v248 = vadd.f32 0.0, %v247
  %v249 = vpop.f32.mrf.mxu0
  %250 = vmatprep.mubr.f32.mxu0 0.0
  %251 = vmatmul.mubr.f32.gmra.mxu0 %v176
  %v252 = vpop.f32.mrf.mxu0
  %v253 = vadd.f32 0.0, %v252
  %v254 = vpop.f32.mrf.mxu0
  %255 = vdwg.mxu0
  %v256 = vadd.f32 %v248, %v13
  %v257 = vadd.f32 %v253, %v13
  %v258 = vmax.f32 %v256, 0.0
  %v259 = vmax.f32 %v257, 0.0
  %v261 = vsel %vm133, %v258, 0
  %v264 = vsel %vm133, %v259, 0
  %266 = vmatprep.subr.mxu0 0.0
  %267 = vmatpush1.msra.mxu0 0.0
  %268 = vmatprep.subr.mxu0 0.0
  %269 = vmatpush1.msra.mxu0 0.0
  %270 = vmatprep.subr.mxu0 0.0
  %271 = vmatpush1.msra.mxu0 0.0
  %272 = vmatprep.subr.mxu0 0.0
  %273 = vmatpush1.msra.mxu0 0.0
  %274 = vmatprep.subr.mxu0 0.0
  %275 = vmatpush1.msra.mxu0 0.0
  %276 = vmatprep.subr.mxu0 0.0
  %277 = vmatpush1.msra.mxu0 0.0
  %278 = vmatprep.subr.mxu0 0.0
  %279 = vmatpush1.msra.mxu0 0.0
  %280 = vmatprep.subr.mxu0 0.0
  %281 = vmatpush1.msra.mxu0 0.0
  %282 = vmatprep.subr.mxu0 0.0
  %283 = vmatpush1.msra.mxu0 0.0
  %284 = vmatprep.subr.mxu0 0.0
  %285 = vmatpush1.msra.mxu0 0.0
  %286 = vmatprep.subr.mxu0 0.0
  %287 = vmatpush1.msra.mxu0 0.0
  %288 = vmatprep.subr.mxu0 0.0
  %289 = vmatpush1.msra.mxu0 0.0
  %290 = vmatprep.subr.mxu0 0.0
  %291 = vmatpush1.msra.mxu0 0.0
  %292 = vmatprep.subr.mxu0 0.0
  %293 = vmatpush1.msra.mxu0 0.0
  %294 = vmatprep.subr.mxu0 0.0
  %295 = vmatpush1.msra.mxu0 0.0
  %296 = vmatprep.subr.mxu0 %v22
  %297 = vmatpush1.msra.mxu0 %v21
  %298 = vmatprep.subr.mxu0 0.0
  %299 = vmatpush2.msra.mxu0 0.0
  %300 = vmatprep.subr.mxu0 0.0
  %301 = vmatpush2.msra.mxu0 0.0
  %302 = vmatprep.subr.mxu0 0.0
  %303 = vmatpush2.msra.mxu0 0.0
  %304 = vmatprep.subr.mxu0 0.0
  %305 = vmatpush2.msra.mxu0 0.0
  %306 = vmatprep.subr.mxu0 0.0
  %307 = vmatpush2.msra.mxu0 0.0
  %308 = vmatprep.subr.mxu0 0.0
  %309 = vmatpush2.msra.mxu0 0.0
  %310 = vmatprep.subr.mxu0 0.0
  %311 = vmatpush2.msra.mxu0 0.0
  %312 = vmatprep.subr.mxu0 0.0
  %313 = vmatpush2.msra.mxu0 0.0
  %314 = vmatprep.subr.mxu0 0.0
  %315 = vmatpush2.msra.mxu0 0.0
  %316 = vmatprep.subr.mxu0 0.0
  %317 = vmatpush2.msra.mxu0 0.0
  %318 = vmatprep.subr.mxu0 0.0
  %319 = vmatpush2.msra.mxu0 0.0
  %320 = vmatprep.subr.mxu0 0.0
  %321 = vmatpush2.msra.mxu0 0.0
  %322 = vmatprep.subr.mxu0 0.0
  %323 = vmatpush2.msra.mxu0 0.0
  %324 = vmatprep.subr.mxu0 0.0
  %325 = vmatpush2.msra.mxu0 0.0
  %326 = vmatprep.subr.mxu0 0.0
  %327 = vmatpush2.msra.mxu0 0.0
  %328 = vmatprep.subr.mxu0 0.0
  %329 = vmatpush2.msra.mxu0 0.0
  %330 = vmatprep.mubr.f32.mxu0 0.0
  %331 = vmatmul.mubr.f32.gmra.mxu0 %v261
  %v332 = vpop.f32.mrf.mxu0
  %v333 = vadd.f32 %v164, %v332
  %v334 = vpop.f32.mrf.mxu0
  %v335 = vadd.f32 %v168, %v334
  %336 = vmatprep.mubr.f32.mxu0 0.0
  %337 = vmatmul.mubr.f32.gmra.mxu0 %v264
  %v338 = vpop.f32.mrf.mxu0
  %v339 = vadd.f32 %v164, %v338
  %v340 = vpop.f32.mrf.mxu0
  %v341 = vadd.f32 %v168, %v340
  %342 = vdwg.mxu0
  %v343 = vmax.f32 %v333, 0.0
  %v344 = vmax.f32 %v335, 0.0
  %v345 = vmax.f32 %v339, 0.0
  %v346 = vmax.f32 %v341, 0.0
  %v348 = vsel %vm142, %v344, 0
  %v351 = vsel %vm142, %v346, 0
  %v354 = vsel %vm142, %v29, 0
  %356 = vmatprep.subr.mxu0 0.0
  %357 = vmatpush1.xpose.msra.mxu0 0.0
  %358 = vmatprep.subr.mxu0 0.0
  %359 = vmatpush1.xpose.msra.mxu0 0.0
  %360 = vmatprep.subr.mxu0 0.0
  %361 = vmatpush1.xpose.msra.mxu0 0.0
  %362 = vmatprep.subr.mxu0 0.0
  %363 = vmatpush1.xpose.msra.mxu0 0.0
  %364 = vmatprep.subr.mxu0 0.0
  %365 = vmatpush1.xpose.msra.mxu0 0.0
  %366 = vmatprep.subr.mxu0 0.0
  %367 = vmatpush1.xpose.msra.mxu0 0.0
  %368 = vmatprep.subr.mxu0 0.0
  %369 = vmatpush1.xpose.msra.mxu0 0.0
  %370 = vmatprep.subr.mxu0 0.0
  %371 = vmatpush1.xpose.msra.mxu0 0.0
  %372 = vmatprep.subr.mxu0 0.0
  %373 = vmatpush1.xpose.msra.mxu0 0.0
  %374 = vmatprep.subr.mxu0 0.0
  %375 = vmatpush1.xpose.msra.mxu0 0.0
  %376 = vmatprep.subr.mxu0 0.0
  %377 = vmatpush1.xpose.msra.mxu0 0.0
  %378 = vmatprep.subr.mxu0 0.0
  %379 = vmatpush1.xpose.msra.mxu0 0.0
  %380 = vmatprep.subr.mxu0 0.0
  %381 = vmatpush1.xpose.msra.mxu0 0.0
  %382 = vmatprep.subr.mxu0 0.0
  %383 = vmatpush1.xpose.msra.mxu0 0.0
  %384 = vmatprep.subr.mxu0 0.0
  %385 = vmatpush1.xpose.msra.mxu0 0.0
  %386 = vmatprep.subr.mxu0 %v354
  %387 = vmatpush1.xpose.msra.mxu0 %v28
  %388 = vmatprep.subr.mxu0 0.0
  %389 = vmatpush2.xpose.msra.mxu0 0.0
  %390 = vmatprep.subr.mxu0 0.0
  %391 = vmatpush2.xpose.msra.mxu0 0.0
  %392 = vmatprep.subr.mxu0 0.0
  %393 = vmatpush2.xpose.msra.mxu0 0.0
  %394 = vmatprep.subr.mxu0 0.0
  %395 = vmatpush2.xpose.msra.mxu0 0.0
  %396 = vmatprep.subr.mxu0 0.0
  %397 = vmatpush2.xpose.msra.mxu0 0.0
  %398 = vmatprep.subr.mxu0 0.0
  %399 = vmatpush2.xpose.msra.mxu0 0.0
  %400 = vmatprep.subr.mxu0 0.0
  %401 = vmatpush2.xpose.msra.mxu0 0.0
  %402 = vmatprep.subr.mxu0 0.0
  %403 = vmatpush2.xpose.msra.mxu0 0.0
  %404 = vmatprep.subr.mxu0 0.0
  %405 = vmatpush2.xpose.msra.mxu0 0.0
  %406 = vmatprep.subr.mxu0 0.0
  %407 = vmatpush2.xpose.msra.mxu0 0.0
  %408 = vmatprep.subr.mxu0 0.0
  %409 = vmatpush2.xpose.msra.mxu0 0.0
  %410 = vmatprep.subr.mxu0 0.0
  %411 = vmatpush2.xpose.msra.mxu0 0.0
  %412 = vmatprep.subr.mxu0 0.0
  %413 = vmatpush2.xpose.msra.mxu0 0.0
  %414 = vmatprep.subr.mxu0 0.0
  %415 = vmatpush2.xpose.msra.mxu0 0.0
  %416 = vmatprep.subr.mxu0 0.0
  %417 = vmatpush2.xpose.msra.mxu0 0.0
  %418 = vmatprep.subr.mxu0 0.0
  %419 = vmatpush2.xpose.msra.mxu0 0.0
  %420 = vmatprep.mubr.f32.mxu0 %v348
  %421 = vmatmul.mubr.f32.gmra.mxu0 %v343
  %v422 = vpop.f32.mrf.mxu0
  %v423 = vadd.f32 %v16, %v422
  %v424 = vpop.f32.mrf.mxu0
  %425 = vmatprep.mubr.f32.mxu0 %v351
  %426 = vmatmul.mubr.f32.gmra.mxu0 %v345
  %v427 = vpop.f32.mrf.mxu0
  %v428 = vadd.f32 %v16, %v427
  %v429 = vpop.f32.mrf.mxu0
  %430 = vdwg.mxu0
  %v431 = vmax.f32 %v423, 0.0
  %v432 = vmax.f32 %v428, 0.0
  %v434 = vsel %vm133, %v431, 0
  %v437 = vsel %vm133, %v432, 0
  %439 = vmatprep.subr.mxu0 0.0
  %440 = vmatpush1.msra.mxu0 0.0
  %441 = vmatprep.subr.mxu0 0.0
  %442 = vmatpush1.msra.mxu0 0.0
  %443 = vmatprep.subr.mxu0 0.0
  %444 = vmatpush1.msra.mxu0 0.0
  %445 = vmatprep.subr.mxu0 0.0
  %446 = vmatpush1.msra.mxu0 0.0
  %447 = vmatprep.subr.mxu0 0.0
  %448 = vmatpush1.msra.mxu0 0.0
  %449 = vmatprep.subr.mxu0 0.0
  %450 = vmatpush1.msra.mxu0 0.0
  %451 = vmatprep.subr.mxu0 0.0
  %452 = vmatpush1.msra.mxu0 0.0
  %453 = vmatprep.subr.mxu0 0.0
  %454 = vmatpush1.msra.mxu0 0.0
  %455 = vmatprep.subr.mxu0 0.0
  %456 = vmatpush1.msra.mxu0 0.0
  %457 = vmatprep.subr.mxu0 0.0
  %458 = vmatpush1.msra.mxu0 0.0
  %459 = vmatprep.subr.mxu0 0.0
  %460 = vmatpush1.msra.mxu0 0.0
  %461 = vmatprep.subr.mxu0 0.0
  %462 = vmatpush1.msra.mxu0 0.0
  %463 = vmatprep.subr.mxu0 0.0
  %464 = vmatpush1.msra.mxu0 0.0
  %465 = vmatprep.subr.mxu0 0.0
  %466 = vmatpush1.msra.mxu0 0.0
  %467 = vmatprep.subr.mxu0 0.0
  %468 = vmatpush1.msra.mxu0 0.0
  %469 = vmatprep.subr.mxu0 0.0
  %470 = vmatpush1.msra.mxu0 %v23
  %471 = vmatprep.subr.mxu0 0.0
  %472 = vmatpush2.msra.mxu0 0.0
  %473 = vmatprep.subr.mxu0 0.0
  %474 = vmatpush2.msra.mxu0 0.0
  %475 = vmatprep.subr.mxu0 0.0
  %476 = vmatpush2.msra.mxu0 0.0
  %477 = vmatprep.subr.mxu0 0.0
  %478 = vmatpush2.msra.mxu0 0.0
  %479 = vmatprep.subr.mxu0 0.0
  %480 = vmatpush2.msra.mxu0 0.0
  %481 = vmatprep.subr.mxu0 0.0
  %482 = vmatpush2.msra.mxu0 0.0
  %483 = vmatprep.subr.mxu0 0.0
  %484 = vmatpush2.msra.mxu0 0.0
  %485 = vmatprep.subr.mxu0 0.0
  %486 = vmatpush2.msra.mxu0 0.0
  %487 = vmatprep.subr.mxu0 0.0
  %488 = vmatpush2.msra.mxu0 0.0
  %489 = vmatprep.subr.mxu0 0.0
  %490 = vmatpush2.msra.mxu0 0.0
  %491 = vmatprep.subr.mxu0 0.0
  %492 = vmatpush2.msra.mxu0 0.0
  %493 = vmatprep.subr.mxu0 0.0
  %494 = vmatpush2.msra.mxu0 0.0
  %495 = vmatprep.subr.mxu0 0.0
  %496 = vmatpush2.msra.mxu0 0.0
  %497 = vmatprep.subr.mxu0 0.0
  %498 = vmatpush2.msra.mxu0 0.0
  %499 = vmatprep.subr.mxu0 0.0
  %500 = vmatpush2.msra.mxu0 0.0
  %501 = vmatprep.subr.mxu0 0.0
  %502 = vmatpush2.msra.mxu0 0.0
  %503 = vmatprep.mubr.f32.mxu0 0.0
  %504 = vmatmul.mubr.f32.gmra.mxu0 %v434
  %v505 = vpop.f32.mrf.mxu0
  %v506 = vadd.f32 %v17, %v505
  %v507 = vpop.f32.mrf.mxu0
  %508 = vmatprep.mubr.f32.mxu0 0.0
  %509 = vmatmul.mubr.f32.gmra.mxu0 %v437
  %v510 = vpop.f32.mrf.mxu0
  %v511 = vadd.f32 %v17, %v510
  %v512 = vpop.f32.mrf.mxu0
  %513 = vdwg.mxu0
  %v514 = vmax.f32 %v506, 0.0
  %v515 = vmax.f32 %v511, 0.0
  %v517 = vsel %vm136, %v514, 0
  %v520 = vsel %vm136, %v515, 0
  %v523 = vsel %vm136, %v25, 0
  %525 = vmatprep.subr.mxu0 0.0
  %526 = vmatpush1.xpose.msra.mxu0 0.0
  %527 = vmatprep.subr.mxu0 0.0
  %528 = vmatpush1.xpose.msra.mxu0 0.0
  %529 = vmatprep.subr.mxu0 0.0
  %530 = vmatpush1.xpose.msra.mxu0 0.0
  %531 = vmatprep.subr.mxu0 0.0
  %532 = vmatpush1.xpose.msra.mxu0 0.0
  %533 = vmatprep.subr.mxu0 0.0
  %534 = vmatpush1.xpose.msra.mxu0 0.0
  %535 = vmatprep.subr.mxu0 0.0
  %536 = vmatpush1.xpose.msra.mxu0 0.0
  %537 = vmatprep.subr.mxu0 0.0
  %538 = vmatpush1.xpose.msra.mxu0 0.0
  %539 = vmatprep.subr.mxu0 0.0
  %540 = vmatpush1.xpose.msra.mxu0 0.0
  %541 = vmatprep.subr.mxu0 0.0
  %542 = vmatpush1.xpose.msra.mxu0 0.0
  %543 = vmatprep.subr.mxu0 0.0
  %544 = vmatpush1.xpose.msra.mxu0 0.0
  %545 = vmatprep.subr.mxu0 0.0
  %546 = vmatpush1.xpose.msra.mxu0 0.0
  %547 = vmatprep.subr.mxu0 0.0
  %548 = vmatpush1.xpose.msra.mxu0 0.0
  %549 = vmatprep.subr.mxu0 0.0
  %550 = vmatpush1.xpose.msra.mxu0 0.0
  %551 = vmatprep.subr.mxu0 0.0
  %552 = vmatpush1.xpose.msra.mxu0 0.0
  %553 = vmatprep.subr.mxu0 0.0
  %554 = vmatpush1.xpose.msra.mxu0 0.0
  %555 = vmatprep.subr.mxu0 0.0
  %556 = vmatpush1.xpose.msra.mxu0 %v523
  %557 = vmatprep.subr.mxu0 0.0
  %558 = vmatpush2.xpose.msra.mxu0 0.0
  %559 = vmatprep.subr.mxu0 0.0
  %560 = vmatpush2.xpose.msra.mxu0 0.0
  %561 = vmatprep.subr.mxu0 0.0
  %562 = vmatpush2.xpose.msra.mxu0 0.0
  %563 = vmatprep.subr.mxu0 0.0
  %564 = vmatpush2.xpose.msra.mxu0 0.0
  %565 = vmatprep.subr.mxu0 0.0
  %566 = vmatpush2.xpose.msra.mxu0 0.0
  %567 = vmatprep.subr.mxu0 0.0
  %568 = vmatpush2.xpose.msra.mxu0 0.0
  %569 = vmatprep.subr.mxu0 0.0
  %570 = vmatpush2.xpose.msra.mxu0 0.0
  %571 = vmatprep.subr.mxu0 0.0
  %572 = vmatpush2.xpose.msra.mxu0 0.0
  %573 = vmatprep.subr.mxu0 0.0
  %574 = vmatpush2.xpose.msra.mxu0 0.0
  %575 = vmatprep.subr.mxu0 0.0
  %576 = vmatpush2.xpose.msra.mxu0 0.0
  %577 = vmatprep.subr.mxu0 0.0
  %578 = vmatpush2.xpose.msra.mxu0 0.0
  %579 = vmatprep.subr.mxu0 0.0
  %580 = vmatpush2.xpose.msra.mxu0 0.0
  %581 = vmatprep.subr.mxu0 0.0
  %582 = vmatpush2.xpose.msra.mxu0 0.0
  %583 = vmatprep.subr.mxu0 0.0
  %584 = vmatpush2.xpose.msra.mxu0 0.0
  %585 = vmatprep.subr.mxu0 0.0
  %586 = vmatpush2.xpose.msra.mxu0 0.0
  %587 = vmatprep.subr.mxu0 0.0
  %588 = vmatpush2.xpose.msra.mxu0 0.0
  %589 = vmatprep.mubr.f32.mxu0 0.0
  %590 = vmatmul.mubr.f32.gmra.mxu0 %v517
  %v591 = vpop.f32.mrf.mxu0
  %v592 = vadd.f32 %v20, %v591
  %v593 = vpop.f32.mrf.mxu0
  %594 = vmatprep.mubr.f32.mxu0 0.0
  %595 = vmatmul.mubr.f32.gmra.mxu0 %v520
  %v596 = vpop.f32.mrf.mxu0
  %v597 = vadd.f32 %v20, %v596
  %v598 = vpop.f32.mrf.mxu0
  %599 = vdwg.mxu0
  %v600 = vxor.u32 %v592, 2147483648
  %v601 = vxor.u32 %v597, 2147483648
  %v602 = vmul.f32 %v600, 1.442695
  %v603 = vpow.pop %v602
  %v604 = vmul.f32 %v601, 1.442695
  %v605 = vpow.pop %v604
  %v606 = vadd.f32 %v603, 1.0
  %v607 = vadd.f32 %v605, 1.0
  %v608 = vrcp.pop %v606
  %v609 = vmul.f32 1.0, %v608
  %v610 = vrcp.pop %v607
  %v611 = vmul.f32 1.0, %v610
  %614 = vrot.lane.b32.xlu0 %v609, 8
  %v615 = vpop.permute.xlu0 %614
  %616 = vrot.lane.b32.xlu0 %v611, 8
  %v617 = vpop.permute.xlu0 %616
  %620 = vrot.lane.b32.xlu0 %v609, 16
  %v621 = vpop.permute.xlu0 %620
  %622 = vrot.lane.b32.xlu0 %v611, 16
  %v623 = vpop.permute.xlu0 %622
  %626 = vrot.lane.b32.xlu0 %v609, 24
  %v627 = vpop.permute.xlu0 %626
  %628 = vrot.lane.b32.xlu0 %v611, 24
  %v629 = vpop.permute.xlu0 %628
  %632 = vrot.lane.b32.xlu0 %v609, 32
  %v633 = vpop.permute.xlu0 %632
  %634 = vrot.lane.b32.xlu0 %v611, 32
  %v635 = vpop.permute.xlu0 %634
  %638 = vrot.lane.b32.xlu0 %v609, 40
  %v639 = vpop.permute.xlu0 %638
  %640 = vrot.lane.b32.xlu0 %v611, 40
  %v641 = vpop.permute.xlu0 %640
  %644 = vrot.lane.b32.xlu0 %v609, 48
  %v645 = vpop.permute.xlu0 %644
  %646 = vrot.lane.b32.xlu0 %v611, 48
  %v647 = vpop.permute.xlu0 %646
  %650 = vrot.lane.b32.xlu0 %v609, 56
  %v651 = vpop.permute.xlu0 %650
  %652 = vrot.lane.b32.xlu0 %v611, 56
  %v653 = vpop.permute.xlu0 %652
  %656 = vrot.lane.b32.xlu0 %v609, 64
  %v657 = vpop.permute.xlu0 %656
  %658 = vrot.lane.b32.xlu0 %v611, 64
  %v659 = vpop.permute.xlu0 %658
  %662 = vrot.lane.b32.xlu0 %v609, 72
  %v663 = vpop.permute.xlu0 %662
  %664 = vrot.lane.b32.xlu0 %v611, 72
  %v665 = vpop.permute.xlu0 %664
  %v668 = vsel %vm133, %v609, %v615
  %v669 = vsel %vm133, %v611, %v617
  %v670 = vsel %vm136, %v668, %v621
  %v671 = vsel %vm136, %v669, %v623
  %v672 = vsel %vm139, %v670, %v627
  %v673 = vsel %vm139, %v671, %v629
  %v674 = vsel %vm142, %v672, %v633
  %v675 = vsel %vm142, %v673, %v635
  %v676 = vsel %vm145, %v674, %v639
  %v677 = vsel %vm145, %v675, %v641
  %v678 = vsel %vm148, %v676, %v645
  %v679 = vsel %vm148, %v677, %v647
  %v680 = vsel %vm151, %v678, %v651
  %v681 = vsel %vm151, %v679, %v653
  %v682 = vsel %vm154, %v680, %v657
  %v683 = vsel %vm154, %v681, %v659
  %v684 = vsel %vm157, %v682, %v663
  %v685 = vsel %vm157, %v683, %v665
  %v686 = vsub.f32 %v684, %v158
  %v687 = vsub.f32 %v685, %v159
  %v688 = vmul.f32 %v686, %v686
  %v689 = vmul.f32 %v687, %v687
  %v691 = vsel %vm171, %v688, 0
  %v694 = vsel %vm171, %v689, 0
  %v697 = vsel %vm171, %v27, 0
  %699 = vmatprep.subr.mxu0 0.0
  %700 = vmatpush1.xpose.msra.mxu0 0.0
  %701 = vmatprep.subr.mxu0 0.0
  %702 = vmatpush1.xpose.msra.mxu0 0.0
  %703 = vmatprep.subr.mxu0 0.0
  %704 = vmatpush1.xpose.msra.mxu0 0.0
  %705 = vmatprep.subr.mxu0 0.0
  %706 = vmatpush1.xpose.msra.mxu0 0.0
  %707 = vmatprep.subr.mxu0 0.0
  %708 = vmatpush1.xpose.msra.mxu0 0.0
  %709 = vmatprep.subr.mxu0 0.0
  %710 = vmatpush1.xpose.msra.mxu0 0.0
  %711 = vmatprep.subr.mxu0 0.0
  %712 = vmatpush1.xpose.msra.mxu0 0.0
  %713 = vmatprep.subr.mxu0 0.0
  %714 = vmatpush1.xpose.msra.mxu0 0.0
  %715 = vmatprep.subr.mxu0 0.0
  %716 = vmatpush1.xpose.msra.mxu0 0.0
  %717 = vmatprep.subr.mxu0 0.0
  %718 = vmatpush1.xpose.msra.mxu0 0.0
  %719 = vmatprep.subr.mxu0 0.0
  %720 = vmatpush1.xpose.msra.mxu0 0.0
  %721 = vmatprep.subr.mxu0 0.0
  %722 = vmatpush1.xpose.msra.mxu0 0.0
  %723 = vmatprep.subr.mxu0 0.0
  %724 = vmatpush1.xpose.msra.mxu0 0.0
  %725 = vmatprep.subr.mxu0 0.0
  %726 = vmatpush1.xpose.msra.mxu0 0.0
  %727 = vmatprep.subr.mxu0 0.0
  %728 = vmatpush1.xpose.msra.mxu0 0.0
  %729 = vmatprep.subr.mxu0 0.0
  %730 = vmatpush1.xpose.msra.mxu0 %v697
  %731 = vmatprep.subr.mxu0 0.0
  %732 = vmatpush2.xpose.msra.mxu0 0.0
  %733 = vmatprep.subr.mxu0 0.0
  %734 = vmatpush2.xpose.msra.mxu0 0.0
  %735 = vmatprep.subr.mxu0 0.0
  %736 = vmatpush2.xpose.msra.mxu0 0.0
  %737 = vmatprep.subr.mxu0 0.0
  %738 = vmatpush2.xpose.msra.mxu0 0.0
  %739 = vmatprep.subr.mxu0 0.0
  %740 = vmatpush2.xpose.msra.mxu0 0.0
  %741 = vmatprep.subr.mxu0 0.0
  %742 = vmatpush2.xpose.msra.mxu0 0.0
  %743 = vmatprep.subr.mxu0 0.0
  %744 = vmatpush2.xpose.msra.mxu0 0.0
  %745 = vmatprep.subr.mxu0 0.0
  %746 = vmatpush2.xpose.msra.mxu0 0.0
  %747 = vmatprep.subr.mxu0 0.0
  %748 = vmatpush2.xpose.msra.mxu0 0.0
  %749 = vmatprep.subr.mxu0 0.0
  %750 = vmatpush2.xpose.msra.mxu0 0.0
  %751 = vmatprep.subr.mxu0 0.0
  %752 = vmatpush2.xpose.msra.mxu0 0.0
  %753 = vmatprep.subr.mxu0 0.0
  %754 = vmatpush2.xpose.msra.mxu0 0.0
  %755 = vmatprep.subr.mxu0 0.0
  %756 = vmatpush2.xpose.msra.mxu0 0.0
  %757 = vmatprep.subr.mxu0 0.0
  %758 = vmatpush2.xpose.msra.mxu0 0.0
  %759 = vmatprep.subr.mxu0 0.0
  %760 = vmatpush2.xpose.msra.mxu0 0.0
  %761 = vmatprep.subr.mxu0 0.0
  %762 = vmatpush2.xpose.msra.mxu0 0.0
  %763 = vmatprep.mubr.f32.mxu0 0.0
  %764 = vmatmul.mubr.f32.gmra.mxu0 %v691
  %v765 = vpop.f32.mrf.mxu0
  %v766 = vadd.f32 0.0, %v765
  %v767 = vpop.f32.mrf.mxu0
  %768 = vmatprep.mubr.f32.mxu0 0.0
  %769 = vmatmul.mubr.f32.gmra.mxu0 %v694
  %v770 = vpop.f32.mrf.mxu0
  %v771 = vadd.f32 0.0, %v770
  %v772 = vpop.f32.mrf.mxu0
  %773 = vdwg.mxu0
  %v774 = vadd.f32 %v248, %v766
  %v775 = vadd.f32 %v253, %v771
  %v776 = vadd.f32 %v774, %v13
  %v777 = vadd.f32 %v775, %v13
  %v778 = vmax.f32 %v776, 0.0
  %v779 = vmax.f32 %v777, 0.0
  %v781 = vsel %vm133, %v778, 0
  %v784 = vsel %vm133, %v779, 0
  %786 = vmatprep.subr.mxu0 0.0
  %787 = vmatpush1.msra.mxu0 0.0
  %788 = vmatprep.subr.mxu0 0.0
  %789 = vmatpush1.msra.mxu0 0.0
  %790 = vmatprep.subr.mxu0 0.0
  %791 = vmatpush1.msra.mxu0 0.0
  %792 = vmatprep.subr.mxu0 0.0
  %793 = vmatpush1.msra.mxu0 0.0
  %794 = vmatprep.subr.mxu0 0.0
  %795 = vmatpush1.msra.mxu0 0.0
  %796 = vmatprep.subr.mxu0 0.0
  %797 = vmatpush1.msra.mxu0 0.0
  %798 = vmatprep.subr.mxu0 0.0
  %799 = vmatpush1.msra.mxu0 0.0
  %800 = vmatprep.subr.mxu0 0.0
  %801 = vmatpush1.msra.mxu0 0.0
  %802 = vmatprep.subr.mxu0 0.0
  %803 = vmatpush1.msra.mxu0 0.0
  %804 = vmatprep.subr.mxu0 0.0
  %805 = vmatpush1.msra.mxu0 0.0
  %806 = vmatprep.subr.mxu0 0.0
  %807 = vmatpush1.msra.mxu0 0.0
  %808 = vmatprep.subr.mxu0 0.0
  %809 = vmatpush1.msra.mxu0 0.0
  %810 = vmatprep.subr.mxu0 0.0
  %811 = vmatpush1.msra.mxu0 0.0
  %812 = vmatprep.subr.mxu0 0.0
  %813 = vmatpush1.msra.mxu0 0.0
  %814 = vmatprep.subr.mxu0 0.0
  %815 = vmatpush1.msra.mxu0 0.0
  %816 = vmatprep.subr.mxu0 %v22
  %817 = vmatpush1.msra.mxu0 %v21
  %818 = vmatprep.subr.mxu0 0.0
  %819 = vmatpush2.msra.mxu0 0.0
  %820 = vmatprep.subr.mxu0 0.0
  %821 = vmatpush2.msra.mxu0 0.0
  %822 = vmatprep.subr.mxu0 0.0
  %823 = vmatpush2.msra.mxu0 0.0
  %824 = vmatprep.subr.mxu0 0.0
  %825 = vmatpush2.msra.mxu0 0.0
  %826 = vmatprep.subr.mxu0 0.0
  %827 = vmatpush2.msra.mxu0 0.0
  %828 = vmatprep.subr.mxu0 0.0
  %829 = vmatpush2.msra.mxu0 0.0
  %830 = vmatprep.subr.mxu0 0.0
  %831 = vmatpush2.msra.mxu0 0.0
  %832 = vmatprep.subr.mxu0 0.0
  %833 = vmatpush2.msra.mxu0 0.0
  %834 = vmatprep.subr.mxu0 0.0
  %835 = vmatpush2.msra.mxu0 0.0
  %836 = vmatprep.subr.mxu0 0.0
  %837 = vmatpush2.msra.mxu0 0.0
  %838 = vmatprep.subr.mxu0 0.0
  %839 = vmatpush2.msra.mxu0 0.0
  %840 = vmatprep.subr.mxu0 0.0
  %841 = vmatpush2.msra.mxu0 0.0
  %842 = vmatprep.subr.mxu0 0.0
  %843 = vmatpush2.msra.mxu0 0.0
  %844 = vmatprep.subr.mxu0 0.0
  %845 = vmatpush2.msra.mxu0 0.0
  %846 = vmatprep.subr.mxu0 0.0
  %847 = vmatpush2.msra.mxu0 0.0
  %848 = vmatprep.subr.mxu0 0.0
  %849 = vmatpush2.msra.mxu0 0.0
  %850 = vmatprep.mubr.f32.mxu0 0.0
  %851 = vmatmul.mubr.f32.gmra.mxu0 %v781
  %v852 = vpop.f32.mrf.mxu0
  %v853 = vadd.f32 %v164, %v852
  %v854 = vpop.f32.mrf.mxu0
  %v855 = vadd.f32 %v168, %v854
  %856 = vmatprep.mubr.f32.mxu0 0.0
  %857 = vmatmul.mubr.f32.gmra.mxu0 %v784
  %v858 = vpop.f32.mrf.mxu0
  %v859 = vadd.f32 %v164, %v858
  %v860 = vpop.f32.mrf.mxu0
  %v861 = vadd.f32 %v168, %v860
  %862 = vdwg.mxu0
  %v863 = vmax.f32 %v853, 0.0
  %v864 = vmax.f32 %v855, 0.0
  %v865 = vmax.f32 %v859, 0.0
  %v866 = vmax.f32 %v861, 0.0
  %v868 = vsel %vm142, %v864, 0
  %v871 = vsel %vm142, %v866, 0
  %v874 = vsel %vm142, %v31, 0
  %876 = vmatprep.subr.mxu0 0.0
  %877 = vmatpush1.xpose.msra.mxu0 0.0
  %878 = vmatprep.subr.mxu0 0.0
  %879 = vmatpush1.xpose.msra.mxu0 0.0
  %880 = vmatprep.subr.mxu0 0.0
  %881 = vmatpush1.xpose.msra.mxu0 0.0
  %882 = vmatprep.subr.mxu0 0.0
  %883 = vmatpush1.xpose.msra.mxu0 0.0
  %884 = vmatprep.subr.mxu0 0.0
  %885 = vmatpush1.xpose.msra.mxu0 0.0
  %886 = vmatprep.subr.mxu0 0.0
  %887 = vmatpush1.xpose.msra.mxu0 0.0
  %888 = vmatprep.subr.mxu0 0.0
  %889 = vmatpush1.xpose.msra.mxu0 0.0
  %890 = vmatprep.subr.mxu0 0.0
  %891 = vmatpush1.xpose.msra.mxu0 0.0
  %892 = vmatprep.subr.mxu0 0.0
  %893 = vmatpush1.xpose.msra.mxu0 0.0
  %894 = vmatprep.subr.mxu0 0.0
  %895 = vmatpush1.xpose.msra.mxu0 0.0
  %896 = vmatprep.subr.mxu0 0.0
  %897 = vmatpush1.xpose.msra.mxu0 0.0
  %898 = vmatprep.subr.mxu0 0.0
  %899 = vmatpush1.xpose.msra.mxu0 0.0
  %900 = vmatprep.subr.mxu0 0.0
  %901 = vmatpush1.xpose.msra.mxu0 0.0
  %902 = vmatprep.subr.mxu0 0.0
  %903 = vmatpush1.xpose.msra.mxu0 0.0
  %904 = vmatprep.subr.mxu0 0.0
  %905 = vmatpush1.xpose.msra.mxu0 0.0
  %906 = vmatprep.subr.mxu0 %v874
  %907 = vmatpush1.xpose.msra.mxu0 %v30
  %908 = vmatprep.subr.mxu0 0.0
  %909 = vmatpush2.xpose.msra.mxu0 0.0
  %910 = vmatprep.subr.mxu0 0.0
  %911 = vmatpush2.xpose.msra.mxu0 0.0
  %912 = vmatprep.subr.mxu0 0.0
  %913 = vmatpush2.xpose.msra.mxu0 0.0
  %914 = vmatprep.subr.mxu0 0.0
  %915 = vmatpush2.xpose.msra.mxu0 0.0
  %916 = vmatprep.subr.mxu0 0.0
  %917 = vmatpush2.xpose.msra.mxu0 0.0
  %918 = vmatprep.subr.mxu0 0.0
  %919 = vmatpush2.xpose.msra.mxu0 0.0
  %920 = vmatprep.subr.mxu0 0.0
  %921 = vmatpush2.xpose.msra.mxu0 0.0
  %922 = vmatprep.subr.mxu0 0.0
  %923 = vmatpush2.xpose.msra.mxu0 0.0
  %924 = vmatprep.subr.mxu0 0.0
  %925 = vmatpush2.xpose.msra.mxu0 0.0
  %926 = vmatprep.subr.mxu0 0.0
  %927 = vmatpush2.xpose.msra.mxu0 0.0
  %928 = vmatprep.subr.mxu0 0.0
  %929 = vmatpush2.xpose.msra.mxu0 0.0
  %930 = vmatprep.subr.mxu0 0.0
  %931 = vmatpush2.xpose.msra.mxu0 0.0
  %932 = vmatprep.subr.mxu0 0.0
  %933 = vmatpush2.xpose.msra.mxu0 0.0
  %934 = vmatprep.subr.mxu0 0.0
  %935 = vmatpush2.xpose.msra.mxu0 0.0
  %936 = vmatprep.subr.mxu0 0.0
  %937 = vmatpush2.xpose.msra.mxu0 0.0
  %938 = vmatprep.subr.mxu0 0.0
  %939 = vmatpush2.xpose.msra.mxu0 0.0
  %940 = vmatprep.mubr.f32.mxu0 %v868
  %941 = vmatmul.mubr.f32.gmra.mxu0 %v863
  %v942 = vpop.f32.mrf.mxu0
  %v943 = vadd.f32 %v18, %v942
  %v944 = vpop.f32.mrf.mxu0
  %945 = vmatprep.mubr.f32.mxu0 %v871
  %946 = vmatmul.mubr.f32.gmra.mxu0 %v865
  %v947 = vpop.f32.mrf.mxu0
  %v948 = vadd.f32 %v18, %v947
  %v949 = vpop.f32.mrf.mxu0
  %950 = vdwg.mxu0
  %v951 = vmax.f32 %v943, 0.0
  %v952 = vmax.f32 %v948, 0.0
  %v954 = vsel %vm133, %v951, 0
  %v957 = vsel %vm133, %v952, 0
  %959 = vmatprep.subr.mxu0 0.0
  %960 = vmatpush1.msra.mxu0 0.0
  %961 = vmatprep.subr.mxu0 0.0
  %962 = vmatpush1.msra.mxu0 0.0
  %963 = vmatprep.subr.mxu0 0.0
  %964 = vmatpush1.msra.mxu0 0.0
  %965 = vmatprep.subr.mxu0 0.0
  %966 = vmatpush1.msra.mxu0 0.0
  %967 = vmatprep.subr.mxu0 0.0
  %968 = vmatpush1.msra.mxu0 0.0
  %969 = vmatprep.subr.mxu0 0.0
  %970 = vmatpush1.msra.mxu0 0.0
  %971 = vmatprep.subr.mxu0 0.0
  %972 = vmatpush1.msra.mxu0 0.0
  %973 = vmatprep.subr.mxu0 0.0
  %974 = vmatpush1.msra.mxu0 0.0
  %975 = vmatprep.subr.mxu0 0.0
  %976 = vmatpush1.msra.mxu0 0.0
  %977 = vmatprep.subr.mxu0 0.0
  %978 = vmatpush1.msra.mxu0 0.0
  %979 = vmatprep.subr.mxu0 0.0
  %980 = vmatpush1.msra.mxu0 0.0
  %981 = vmatprep.subr.mxu0 0.0
  %982 = vmatpush1.msra.mxu0 0.0
  %983 = vmatprep.subr.mxu0 0.0
  %984 = vmatpush1.msra.mxu0 0.0
  %985 = vmatprep.subr.mxu0 0.0
  %986 = vmatpush1.msra.mxu0 0.0
  %987 = vmatprep.subr.mxu0 0.0
  %988 = vmatpush1.msra.mxu0 0.0
  %989 = vmatprep.subr.mxu0 0.0
  %990 = vmatpush1.msra.mxu0 %v24
  %991 = vmatprep.subr.mxu0 0.0
  %992 = vmatpush2.msra.mxu0 0.0
  %993 = vmatprep.subr.mxu0 0.0
  %994 = vmatpush2.msra.mxu0 0.0
  %995 = vmatprep.subr.mxu0 0.0
  %996 = vmatpush2.msra.mxu0 0.0
  %997 = vmatprep.subr.mxu0 0.0
  %998 = vmatpush2.msra.mxu0 0.0
  %999 = vmatprep.subr.mxu0 0.0
  %1000 = vmatpush2.msra.mxu0 0.0
  %1001 = vmatprep.subr.mxu0 0.0
  %1002 = vmatpush2.msra.mxu0 0.0
  %1003 = vmatprep.subr.mxu0 0.0
  %1004 = vmatpush2.msra.mxu0 0.0
  %1005 = vmatprep.subr.mxu0 0.0
  %1006 = vmatpush2.msra.mxu0 0.0
  %1007 = vmatprep.subr.mxu0 0.0
  %1008 = vmatpush2.msra.mxu0 0.0
  %1009 = vmatprep.subr.mxu0 0.0
  %1010 = vmatpush2.msra.mxu0 0.0
  %1011 = vmatprep.subr.mxu0 0.0
  %1012 = vmatpush2.msra.mxu0 0.0
  %1013 = vmatprep.subr.mxu0 0.0
  %1014 = vmatpush2.msra.mxu0 0.0
  %1015 = vmatprep.subr.mxu0 0.0
  %1016 = vmatpush2.msra.mxu0 0.0
  %1017 = vmatprep.subr.mxu0 0.0
  %1018 = vmatpush2.msra.mxu0 0.0
  %1019 = vmatprep.subr.mxu0 0.0
  %1020 = vmatpush2.msra.mxu0 0.0
  %1021 = vmatprep.subr.mxu0 0.0
  %1022 = vmatpush2.msra.mxu0 0.0
  %1023 = vmatprep.mubr.f32.mxu0 0.0
  %1024 = vmatmul.mubr.f32.gmra.mxu0 %v954
  %v1025 = vpop.f32.mrf.mxu0
  %v1026 = vadd.f32 %v19, %v1025
  %v1027 = vpop.f32.mrf.mxu0
  %1028 = vmatprep.mubr.f32.mxu0 0.0
  %1029 = vmatmul.mubr.f32.gmra.mxu0 %v957
  %v1030 = vpop.f32.mrf.mxu0
  %v1031 = vadd.f32 %v19, %v1030
  %v1032 = vpop.f32.mrf.mxu0
  %1033 = vdwg.mxu0
  %v1034 = vmax.f32 %v1026, 0.0
  %v1035 = vmax.f32 %v1031, 0.0
  %v1037 = vsel %vm136, %v1034, 0
  %v1040 = vsel %vm136, %v1035, 0
  %1042 = vmatprep.subr.mxu0 0.0
  %1043 = vmatpush1.xpose.msra.mxu0 0.0
  %1044 = vmatprep.subr.mxu0 0.0
  %1045 = vmatpush1.xpose.msra.mxu0 0.0
  %1046 = vmatprep.subr.mxu0 0.0
  %1047 = vmatpush1.xpose.msra.mxu0 0.0
  %1048 = vmatprep.subr.mxu0 0.0
  %1049 = vmatpush1.xpose.msra.mxu0 0.0
  %1050 = vmatprep.subr.mxu0 0.0
  %1051 = vmatpush1.xpose.msra.mxu0 0.0
  %1052 = vmatprep.subr.mxu0 0.0
  %1053 = vmatpush1.xpose.msra.mxu0 0.0
  %1054 = vmatprep.subr.mxu0 0.0
  %1055 = vmatpush1.xpose.msra.mxu0 0.0
  %1056 = vmatprep.subr.mxu0 0.0
  %1057 = vmatpush1.xpose.msra.mxu0 0.0
  %1058 = vmatprep.subr.mxu0 0.0
  %1059 = vmatpush1.xpose.msra.mxu0 0.0
  %1060 = vmatprep.subr.mxu0 0.0
  %1061 = vmatpush1.xpose.msra.mxu0 0.0
  %1062 = vmatprep.subr.mxu0 0.0
  %1063 = vmatpush1.xpose.msra.mxu0 0.0
  %1064 = vmatprep.subr.mxu0 0.0
  %1065 = vmatpush1.xpose.msra.mxu0 0.0
  %1066 = vmatprep.subr.mxu0 0.0
  %1067 = vmatpush1.xpose.msra.mxu0 0.0
  %1068 = vmatprep.subr.mxu0 0.0
  %1069 = vmatpush1.xpose.msra.mxu0 0.0
  %1070 = vmatprep.subr.mxu0 0.0
  %1071 = vmatpush1.xpose.msra.mxu0 0.0
  %1072 = vmatprep.subr.mxu0 0.0
  %1073 = vmatpush1.xpose.msra.mxu0 %v523
  %1074 = vmatprep.subr.mxu0 0.0
  %1075 = vmatpush2.xpose.msra.mxu0 0.0
  %1076 = vmatprep.subr.mxu0 0.0
  %1077 = vmatpush2.xpose.msra.mxu0 0.0
  %1078 = vmatprep.subr.mxu0 0.0
  %1079 = vmatpush2.xpose.msra.mxu0 0.0
  %1080 = vmatprep.subr.mxu0 0.0
  %1081 = vmatpush2.xpose.msra.mxu0 0.0
  %1082 = vmatprep.subr.mxu0 0.0
  %1083 = vmatpush2.xpose.msra.mxu0 0.0
  %1084 = vmatprep.subr.mxu0 0.0
  %1085 = vmatpush2.xpose.msra.mxu0 0.0
  %1086 = vmatprep.subr.mxu0 0.0
  %1087 = vmatpush2.xpose.msra.mxu0 0.0
  %1088 = vmatprep.subr.mxu0 0.0
  %1089 = vmatpush2.xpose.msra.mxu0 0.0
  %1090 = vmatprep.subr.mxu0 0.0
  %1091 = vmatpush2.xpose.msra.mxu0 0.0
  %1092 = vmatprep.subr.mxu0 0.0
  %1093 = vmatpush2.xpose.msra.mxu0 0.0
  %1094 = vmatprep.subr.mxu0 0.0
  %1095 = vmatpush2.xpose.msra.mxu0 0.0
  %1096 = vmatprep.subr.mxu0 0.0
  %1097 = vmatpush2.xpose.msra.mxu0 0.0
  %1098 = vmatprep.subr.mxu0 0.0
  %1099 = vmatpush2.xpose.msra.mxu0 0.0
  %1100 = vmatprep.subr.mxu0 0.0
  %1101 = vmatpush2.xpose.msra.mxu0 0.0
  %1102 = vmatprep.subr.mxu0 0.0
  %1103 = vmatpush2.xpose.msra.mxu0 0.0
  %1104 = vmatprep.subr.mxu0 0.0
  %1105 = vmatpush2.xpose.msra.mxu0 0.0
  %1106 = vmatprep.mubr.f32.mxu0 0.0
  %1107 = vmatmul.mubr.f32.gmra.mxu0 %v1037
  %v1108 = vpop.f32.mrf.mxu0
  %v1109 = vadd.f32 %v20, %v1108
  %v1110 = vpop.f32.mrf.mxu0
  %1111 = vmatprep.mubr.f32.mxu0 0.0
  %1112 = vmatmul.mubr.f32.gmra.mxu0 %v1040
  %v1113 = vpop.f32.mrf.mxu0
  %v1114 = vadd.f32 %v20, %v1113
  %v1115 = vpop.f32.mrf.mxu0
  %1116 = vdwg.mxu0
  %v1117 = vxor.u32 %v1109, 2147483648
  %v1118 = vxor.u32 %v1114, 2147483648
  %v1119 = vmul.f32 %v1117, 1.442695
  %v1120 = vpow.pop %v1119
  %v1121 = vmul.f32 %v1118, 1.442695
  %v1122 = vpow.pop %v1121
  %v1123 = vadd.f32 %v1120, 1.0
  %v1124 = vadd.f32 %v1122, 1.0
  %v1125 = vrcp.pop %v1123
  %v1126 = vmul.f32 1.0, %v1125
  %v1127 = vrcp.pop %v1124
  %v1128 = vmul.f32 1.0, %v1127
  %1129 = vst.msk [vmem:[%s2] sm:$0xff] %vm133, %v609
  %1130 = vst.msk [vmem:[%s2 + $0x8] sm:$0xff] %vm133, %v611
  %1131 = vst.msk [vmem:[%s3] sm:$0xff] %vm133, %v1126
  %1132 = vst.msk [vmem:[%s3 + $0x8] sm:$0xff] %vm133, %v1128
  // Predicated region
  $region10: #{tranad_forward.1} parent=0 // pred_check
    _
  $region11: #{tranad_forward.1} parent=0 // pred_check_branch
    %1134 = sbr.rel (0) target = $region13
  $region12: #{tranad_forward.1} parent=0 // pred_region
    _
  $region13: #{tranad_forward.1} parent=0 // pred_fallthru
    _
  // Predicated region
  $region14: #{tranad_forward.1} parent=0 // pred_check
    _
  $region15: #{tranad_forward.1} parent=0 // pred_check_branch
    %1136 = sbr.rel (0) target = $region17
  $region16: #{tranad_forward.1} parent=0 // pred_region
    _
  $region17: #{tranad_forward.1} parent=0 // pred_fallthru
    _
  // Predicated region
  $region18: #{tranad_forward.1} parent=0 // pred_check
    _
  $region19: #{tranad_forward.1} parent=0 // pred_check_branch
    %1138 = sbr.rel (0) target = $region21
  $region20: #{tranad_forward.1} parent=0 // pred_region
    _
  $region21: #{tranad_forward.1} parent=0 // pred_fallthru
    _
  // Predicated region
  $region22: #{tranad_forward.1} parent=0 // pred_check
    _
  $region23: #{tranad_forward.1} parent=0 // pred_check_branch
    %1140 = sbr.rel (0) target = $region25
  $region24: #{tranad_forward.1} parent=0 // pred_region
    _
  $region25: #{tranad_forward.1} parent=0 // pred_fallthru
    _

</llo_original>
